<compile_context>
chip_gen: v5e
topology: v5e:2x2
jax: 0.10.0
libtpu: 0.0.40
codegen_flags: <defaults>
</compile_context>

<pallas_src>
import jax
import jax.numpy as jnp
from jax.experimental import pallas as pl
from jax.experimental.pallas import tpu as pltpu

LEAKY_SLOPE = 0.01
LN_EPS = 1e-5
LANE = 128
SUBLANE = 8


def _round_up(x, m):
    return ((x + m - 1) // m) * m


def _cdiv(a, b):
    return (a + b - 1) // b


def _chip_info():
    """Returns (physical VMEM bytes, #TensorCores sharing the parallel axis)."""
    kind = ""
    try:
        kind = jax.devices()[0].device_kind.lower()
    except Exception:
        pass
    is_v7 = "v7" in kind
    n_tc = 2 if is_v7 else 1                      # v5e / v6e: 1 TC per chip
    vmem_phys = (64 << 20) if is_v7 else (128 << 20)
    try:                                          # refine if the query works here
        vmem_phys = int(pltpu.get_tpu_info().vmem_capacity_bytes)
    except Exception:
        pass
    return vmem_phys, n_tc


def _disc_kernel(x_ref,
                 w1_ref, b1_ref, g1_ref, be1_ref,
                 w2_ref, b2_ref, g2_ref, be2_ref,
                 wo_ref, bo_ref,
                 o_ref):
    """Fused (Linear -> LeakyReLU -> LayerNorm) x2 -> Linear (lane-padded out)."""

    def block(h, w_ref, b_ref, g_ref, be_ref):
        # Linear on the MXU: low-precision inputs, f32 accumulation.
        hd = jnp.dot(h.astype(w_ref.dtype), w_ref[...],
                     preferred_element_type=jnp.float32)
        hd = hd + b_ref[...]
        # LeakyReLU: max(h, slope*h) == where(h > 0, h, slope*h) for 0<slope<1.
        hd = jnp.maximum(hd, LEAKY_SLOPE * hd)
        # Two-pass LayerNorm over the feature (lane) axis, biased variance
        # (matches torch); two-pass avoids E[h^2] - mu^2 cancellation.
        mu = jnp.mean(hd, axis=-1, keepdims=True)
        c = hd - mu
        var = jnp.mean(c * c, axis=-1, keepdims=True)
        hd = c * jax.lax.rsqrt(var + LN_EPS)
        return hd * g_ref[...] + be_ref[...]

    # x arrives already in the matmul dtype -> feed straight into the first dot
    # (no f32 round-trip on the input tile).
    h = block(x_ref[...], w1_ref, b1_ref, g1_ref, be1_ref)
    h = block(h, w2_ref, b2_ref, g2_ref, be2_ref)

    out = jnp.dot(h.astype(wo_ref.dtype), wo_ref[...],
                  preferred_element_type=jnp.float32)
    o_ref[...] = (out + bo_ref[...]).astype(o_ref.dtype)


def prepare_params(params, matmul_dtype=jnp.bfloat16):
    """One-time parameter prep (dtype cast + lane-pad of the classifier).

    Call once at parameter-load time and reuse across forward calls so weight
    re-cast / re-pad traffic never sits on the per-call critical path.
    """
    n_cls = params["wo"].shape[1]
    n_cls_pad = _round_up(n_cls, LANE)            # lane-dense output slab
    f32 = jnp.float32
    md = jnp.dtype(matmul_dtype)
    prepped = {
        "w1": params["w1"].astype(md),
        "w2": params["w2"].astype(md),
        "wo": jnp.pad(params["wo"].astype(md), ((0, 0), (0, n_cls_pad - n_cls))),
        "bo": jnp.pad(params["bo"].astype(f32), ((0, 0), (0, n_cls_pad - n_cls))),
    }
    for k in ("b1", "g1", "be1", "b2", "g2", "be2"):
        prepped[k] = params[k].astype(f32)
    prepped["_n_cls"] = n_cls
    prepped["_matmul_dtype"] = md
    return prepped


def adversarial_discriminator(x, params, *, batch_tile=None,
                              matmul_dtype=jnp.bfloat16,
                              single_buffer_params=True):
    """x: [B, d_model] -> [B, n_cls].

    `params` may be the raw dict from init_params (auto-prepared) or, better,
    the result of prepare_params() reused across calls.
    """
    if "_n_cls" not in params:
        params = prepare_params(params, matmul_dtype)
    md = params["_matmul_dtype"]
    n_cls = params["_n_cls"]

    B, d_model = x.shape
    n_cls_pad = params["wo"].shape[1]
    out_dtype = x.dtype

    vmem_phys, n_tc = _chip_info()
    vmem_budget = int(vmem_phys * 0.85)           # generation-aware scoped limit

    # Input tile goes in already in the matmul dtype (halves x DMA vs f32 and
    # removes two full-tile cast passes in the kernel).
    x_in = x if x.dtype == md else x.astype(md)

    param_keys = ("w1", "b1", "g1", "be1", "w2", "b2", "g2", "be2", "wo", "bo")
    param_ops = tuple(params[k] for k in param_keys)
    nbytes = lambda a: a.size * a.dtype.itemsize
    param_bytes = sum(nbytes(p) for p in param_ops)
    param_bufs = 1 if single_buffer_params else 2

    def vmem_estimate(bt):
        act = (2 * bt * d_model * md.itemsize
               + 2 * bt * n_cls_pad * jnp.dtype(out_dtype).itemsize)
        live = 6 * bt * d_model * 4               # f32 intermediates + headroom
        return act + param_bufs * param_bytes + live + (2 << 20)

    # ---- batch tiling: biggest M tile that fits; only force >=2 grid steps on
    # multi-TensorCore chips (v7x).  Single-TC v5e/v6e take one large tile.
    if batch_tile is None:
        batch_tile = 256 if vmem_phys <= (64 << 20) else 512
    if B <= SUBLANE:
        bt = B                                     # full-extent block, 1 step
    else:
        bt = max(SUBLANE,
                 (min(int(batch_tile), _round_up(B, SUBLANE)) // SUBLANE) * SUBLANE)
        if n_tc > 1 and _cdiv(B, bt) < n_tc:
            bt = max(SUBLANE, _round_up(_cdiv(_round_up(B, SUBLANE), n_tc), SUBLANE))
        # Keep the step count a multiple of the TC count when that is possible
        # without an ineffective shrink (v7x tail utilization).
        steps = _cdiv(B, bt)
        if n_tc > 1 and steps > 1 and steps % n_tc:
            bt2 = max(SUBLANE,
                      _round_up(_cdiv(B, _round_up(steps, n_tc)), SUBLANE))
            if _cdiv(B, bt2) % n_tc == 0:
                bt = bt2
        # Shrink until the resident-weight design fits the VMEM budget.
        while bt > SUBLANE and vmem_estimate(bt) > vmem_budget:
            bt = max(SUBLANE, ((bt // 2) // SUBLANE) * SUBLANE)
    # TODO(synk): for d_model >= ~3072 on v7x the two bf16 d_model^2 weights do
    # not fit VMEM even single-buffered; a weight-streaming path (pl.ANY weights
    # + pltpu.emit_pipeline over d_model chunks) is needed for that regime.

    grid = (_cdiv(B, bt),)     # ragged last tile is masked by Pallas (no wrapper pad)

    x_spec = pl.BlockSpec((bt, d_model), lambda i: (i, 0))
    out_spec = pl.BlockSpec((bt, n_cls_pad), lambda i: (i, 0))

    def param_spec(shape):
        # Grid-invariant parameter block: same block every step, so default
        # double-buffering is pure VMEM waste -> single-buffer by default.
        kwargs = {}
        if single_buffer_params:
            kwargs["pipeline_mode"] = pl.Buffered(1)
        return pl.BlockSpec(shape, lambda i: (0,) * len(shape), **kwargs)

    in_specs = [x_spec] + [param_spec(p.shape) for p in param_ops]

    flops = B * (4 * d_model * d_model + 2 * d_model * n_cls_pad + 12 * d_model)
    cost = pl.CostEstimate(
        flops=int(flops),
        transcendentals=int(2 * B),
        bytes_accessed=int(nbytes(x_in) + param_bytes
                           + B * n_cls_pad * jnp.dtype(out_dtype).itemsize),
    )

    out = pl.pallas_call(
        _disc_kernel,
        out_shape=jax.ShapeDtypeStruct((B, n_cls_pad), out_dtype),
        grid_spec=pltpu.PrefetchScalarGridSpec(
            num_scalar_prefetch=0,
            grid=grid,
            in_specs=in_specs,
            out_specs=out_spec,
        ),
        compiler_params=pltpu.CompilerParams(
            dimension_semantics=("parallel",),
            vmem_limit_bytes=vmem_budget),
        cost_estimate=cost,
    )(x_in, *param_ops)

    return out[:, :n_cls]


def init_params(key, d_model, n_cls):
    """Deterministic init matching nn.Linear / nn.LayerNorm shapes.

    Linear weights stored as [in, out] (already transposed vs torch's [out, in]).
    """
    ks = jax.random.split(key, 6)
    bound = 1.0 / jnp.sqrt(d_model)

    def lin(kw, kb, fan_in, fan_out):
        w = jax.random.uniform(kw, (fan_in, fan_out), jnp.float32, -bound, bound)
        b = jax.random.uniform(kb, (1, fan_out), jnp.float32, -bound, bound)
        return w, b

    w1, b1 = lin(ks[0], ks[1], d_model, d_model)
    w2, b2 = lin(ks[2], ks[3], d_model, d_model)
    wo, bo = lin(ks[4], ks[5], d_model, n_cls)

    ones = jnp.ones((1, d_model), jnp.float32)
    zeros = jnp.zeros((1, d_model), jnp.float32)

    return {
        "w1": w1, "b1": b1, "g1": ones, "be1": zeros,
        "w2": w2, "b2": b2, "g2": ones, "be2": zeros,
        "wo": wo, "bo": bo,
    }


def reference_forward(x, p, matmul_dtype=jnp.float32):
    """Pure-JAX reference (optionally with the same bf16-input matmul policy)."""
    h = x.astype(jnp.float32)
    for w, b, g, be in [(p["w1"], p["b1"], p["g1"], p["be1"]),
                        (p["w2"], p["b2"], p["g2"], p["be2"])]:
        h = jnp.dot(h.astype(matmul_dtype), w.astype(matmul_dtype),
                    preferred_element_type=jnp.float32) + b
        h = jnp.where(h > 0, h, LEAKY_SLOPE * h)
        mu = jnp.mean(h, axis=-1, keepdims=True)
        var = jnp.mean((h - mu) ** 2, axis=-1, keepdims=True)
        h = (h - mu) * jax.lax.rsqrt(var + LN_EPS)
        h = h * g + be
    return jnp.dot(h.astype(matmul_dtype), p["wo"].astype(matmul_dtype),
                   preferred_element_type=jnp.float32) + p["bo"]


if __name__ == "__main__":
    key = jax.random.PRNGKey(0)
    k_x, k_p, k_x2, k_p2 = jax.random.split(key, 4)

    # ---- small case: single grid step, full-extent batch block ----
    batch, d_model, n_cls = 2, 32, 4
    x = jax.random.normal(k_x, (batch, d_model), jnp.float32)
    raw = init_params(k_p, d_model, n_cls)
    params = prepare_params(raw)            # one-time cast/pad, reused per call

    out = jax.block_until_ready(adversarial_discriminator(x, params))
    assert out.shape == (batch, n_cls), out.shape

    ref_bf16 = reference_forward(x, raw, matmul_dtype=jnp.bfloat16)
    ref_f32 = reference_forward(x, raw, matmul_dtype=jnp.float32)
    assert jnp.allclose(out, ref_bf16, atol=1e-2, rtol=1e-2), (
        f"bf16-ref max abs err {jnp.max(jnp.abs(out - ref_bf16))}")
    assert jnp.allclose(out, ref_f32, atol=5e-2, rtol=5e-2), (
        f"f32-ref max abs err {jnp.max(jnp.abs(out - ref_f32))}")

    # ---- multi-step grid with a ragged last batch tile (no wrapper pad) ----
    batch2, d_model2, n_cls2 = 20, 256, 3
    x2 = jax.random.normal(k_x2, (batch2, d_model2), jnp.float32)
    raw2 = init_params(k_p2, d_model2, n_cls2)
    out2 = jax.block_until_ready(
        adversarial_discriminator(x2, raw2, batch_tile=8))
    assert out2.shape == (batch2, n_cls2), out2.shape
    ref2 = reference_forward(x2, raw2, matmul_dtype=jnp.bfloat16)
    assert jnp.allclose(out2, ref2, atol=2e-2, rtol=2e-2), (
        f"bf16-ref max abs err {jnp.max(jnp.abs(out2 - ref2))}")

    print("KERNEL_OK")
</pallas_src>

<mosaic_0001>
module attributes {stable_mosaic.version = 11 : i64} {
  func.func @_disc_kernel(%arg0: i32, %arg1: memref<2x32xbf16, #tpu.memory_space<vmem>>, %arg2: memref<32x32xbf16, #tpu.memory_space<vmem>>, %arg3: memref<1x32xf32, #tpu.memory_space<vmem>>, %arg4: memref<1x32xf32, #tpu.memory_space<vmem>>, %arg5: memref<1x32xf32, #tpu.memory_space<vmem>>, %arg6: memref<32x32xbf16, #tpu.memory_space<vmem>>, %arg7: memref<1x32xf32, #tpu.memory_space<vmem>>, %arg8: memref<1x32xf32, #tpu.memory_space<vmem>>, %arg9: memref<1x32xf32, #tpu.memory_space<vmem>>, %arg10: memref<32x128xbf16, #tpu.memory_space<vmem>>, %arg11: memref<1x128xf32, #tpu.memory_space<vmem>>, %arg12: memref<2x128xf32, #tpu.memory_space<vmem>>) attributes {dimension_semantics = [#tpu.dimension_semantics<parallel>], iteration_bounds = array<i64: 1>, scalar_prefetch = 0 : i64, scratch_operands = 0 : i64, tpu.core_type = #tpu.core_type<tc>, window_params = [{transform_indices = @transform_0, window_bounds = array<i64: 2, 32>}, {pipeline_mode = #tpu.pipeline_mode<synchronous>, transform_indices = @transform_1, window_bounds = array<i64: 32, 32>}, {pipeline_mode = #tpu.pipeline_mode<synchronous>, transform_indices = @transform_2, window_bounds = array<i64: 1, 32>}, {pipeline_mode = #tpu.pipeline_mode<synchronous>, transform_indices = @transform_3, window_bounds = array<i64: 1, 32>}, {pipeline_mode = #tpu.pipeline_mode<synchronous>, transform_indices = @transform_4, window_bounds = array<i64: 1, 32>}, {pipeline_mode = #tpu.pipeline_mode<synchronous>, transform_indices = @transform_5, window_bounds = array<i64: 32, 32>}, {pipeline_mode = #tpu.pipeline_mode<synchronous>, transform_indices = @transform_6, window_bounds = array<i64: 1, 32>}, {pipeline_mode = #tpu.pipeline_mode<synchronous>, transform_indices = @transform_7, window_bounds = array<i64: 1, 32>}, {pipeline_mode = #tpu.pipeline_mode<synchronous>, transform_indices = @transform_8, window_bounds = array<i64: 1, 32>}, {pipeline_mode = #tpu.pipeline_mode<synchronous>, transform_indices = @transform_9, window_bounds = array<i64: 32, 128>}, {pipeline_mode = #tpu.pipeline_mode<synchronous>, transform_indices = @transform_10, window_bounds = array<i64: 1, 128>}, {transform_indices = @transform_11, window_bounds = array<i64: 2, 128>}]} {
    %c0 = arith.constant 0 : index
    %c0_0 = arith.constant 0 : index
    %0 = vector.load %arg1[%c0, %c0_0] : memref<2x32xbf16, #tpu.memory_space<vmem>>, vector<2x32xbf16>
    %c0_1 = arith.constant 0 : index
    %c0_2 = arith.constant 0 : index
    %1 = vector.load %arg2[%c0_1, %c0_2] : memref<32x32xbf16, #tpu.memory_space<vmem>>, vector<32x32xbf16>
    %cst = arith.constant dense<0.000000e+00> : vector<2x32xf32>
    %2 = tpu.matmul %0, %1, %cst {dimension_numbers = #tpu.dot_dimension_numbers<[1], [0], [0], [1], [0, 0, 1, 1], [], []>} : vector<2x32xbf16>, vector<32x32xbf16>, vector<2x32xf32> -> vector<2x32xf32>
    %c0_3 = arith.constant 0 : index
    %c0_4 = arith.constant 0 : index
    %3 = vector.load %arg3[%c0_3, %c0_4] : memref<1x32xf32, #tpu.memory_space<vmem>>, vector<1x32xf32>
    %4 = vector.broadcast %3 : vector<1x32xf32> to vector<2x32xf32>
    %5 = arith.addf %2, %4 : vector<2x32xf32>
    %cst_5 = arith.constant 0.00999999977 : f32
    %6 = vector.broadcast %cst_5 : f32 to vector<2x32xf32>
    %7 = arith.mulf %6, %5 : vector<2x32xf32>
    %8 = arith.maximumf %5, %7 : vector<2x32xf32>
    %cst_6 = arith.constant dense<0.000000e+00> : vector<2xf32>
    %9 = vector.multi_reduction <add>, %8, %cst_6 [1] : vector<2x32xf32> to vector<2xf32>
    %10 = vector.shape_cast %9 : vector<2xf32> to vector<2x1xf32>
    %cst_7 = arith.constant 3.200000e+01 : f32
    %11 = vector.broadcast %cst_7 : f32 to vector<2x1xf32>
    %12 = arith.divf %10, %11 : vector<2x1xf32>
    %13 = vector.broadcast %12 : vector<2x1xf32> to vector<2x32xf32>
    %14 = arith.subf %8, %13 : vector<2x32xf32>
    %15 = arith.mulf %14, %14 : vector<2x32xf32>
    %cst_8 = arith.constant dense<0.000000e+00> : vector<2xf32>
    %16 = vector.multi_reduction <add>, %15, %cst_8 [1] : vector<2x32xf32> to vector<2xf32>
    %17 = vector.shape_cast %16 : vector<2xf32> to vector<2x1xf32>
    %cst_9 = arith.constant 3.200000e+01 : f32
    %18 = vector.broadcast %cst_9 : f32 to vector<2x1xf32>
    %19 = arith.divf %17, %18 : vector<2x1xf32>
    %cst_10 = arith.constant 9.99999974E-6 : f32
    %20 = vector.broadcast %cst_10 : f32 to vector<2x1xf32>
    %21 = arith.addf %19, %20 : vector<2x1xf32>
    %22 = math.rsqrt %21 : vector<2x1xf32>
    %23 = vector.broadcast %22 : vector<2x1xf32> to vector<2x32xf32>
    %24 = arith.mulf %14, %23 : vector<2x32xf32>
    %c0_11 = arith.constant 0 : index
    %c0_12 = arith.constant 0 : index
    %25 = vector.load %arg4[%c0_11, %c0_12] : memref<1x32xf32, #tpu.memory_space<vmem>>, vector<1x32xf32>
    %26 = vector.broadcast %25 : vector<1x32xf32> to vector<2x32xf32>
    %27 = arith.mulf %24, %26 : vector<2x32xf32>
    %c0_13 = arith.constant 0 : index
    %c0_14 = arith.constant 0 : index
    %28 = vector.load %arg5[%c0_13, %c0_14] : memref<1x32xf32, #tpu.memory_space<vmem>>, vector<1x32xf32>
    %29 = vector.broadcast %28 : vector<1x32xf32> to vector<2x32xf32>
    %30 = arith.addf %27, %29 : vector<2x32xf32>
    %31 = arith.truncf %30 : vector<2x32xf32> to vector<2x32xbf16>
    %c0_15 = arith.constant 0 : index
    %c0_16 = arith.constant 0 : index
    %32 = vector.load %arg6[%c0_15, %c0_16] : memref<32x32xbf16, #tpu.memory_space<vmem>>, vector<32x32xbf16>
    %cst_17 = arith.constant dense<0.000000e+00> : vector<2x32xf32>
    %33 = tpu.matmul %31, %32, %cst_17 {dimension_numbers = #tpu.dot_dimension_numbers<[1], [0], [0], [1], [0, 0, 1, 1], [], []>} : vector<2x32xbf16>, vector<32x32xbf16>, vector<2x32xf32> -> vector<2x32xf32>
    %c0_18 = arith.constant 0 : index
    %c0_19 = arith.constant 0 : index
    %34 = vector.load %arg7[%c0_18, %c0_19] : memref<1x32xf32, #tpu.memory_space<vmem>>, vector<1x32xf32>
    %35 = vector.broadcast %34 : vector<1x32xf32> to vector<2x32xf32>
    %36 = arith.addf %33, %35 : vector<2x32xf32>
    %cst_20 = arith.constant 0.00999999977 : f32
    %37 = vector.broadcast %cst_20 : f32 to vector<2x32xf32>
    %38 = arith.mulf %37, %36 : vector<2x32xf32>
    %39 = arith.maximumf %36, %38 : vector<2x32xf32>
    %cst_21 = arith.constant dense<0.000000e+00> : vector<2xf32>
    %40 = vector.multi_reduction <add>, %39, %cst_21 [1] : vector<2x32xf32> to vector<2xf32>
    %41 = vector.shape_cast %40 : vector<2xf32> to vector<2x1xf32>
    %cst_22 = arith.constant 3.200000e+01 : f32
    %42 = vector.broadcast %cst_22 : f32 to vector<2x1xf32>
    %43 = arith.divf %41, %42 : vector<2x1xf32>
    %44 = vector.broadcast %43 : vector<2x1xf32> to vector<2x32xf32>
    %45 = arith.subf %39, %44 : vector<2x32xf32>
    %46 = arith.mulf %45, %45 : vector<2x32xf32>
    %cst_23 = arith.constant dense<0.000000e+00> : vector<2xf32>
    %47 = vector.multi_reduction <add>, %46, %cst_23 [1] : vector<2x32xf32> to vector<2xf32>
    %48 = vector.shape_cast %47 : vector<2xf32> to vector<2x1xf32>
    %cst_24 = arith.constant 3.200000e+01 : f32
    %49 = vector.broadcast %cst_24 : f32 to vector<2x1xf32>
    %50 = arith.divf %48, %49 : vector<2x1xf32>
    %cst_25 = arith.constant 9.99999974E-6 : f32
    %51 = vector.broadcast %cst_25 : f32 to vector<2x1xf32>
    %52 = arith.addf %50, %51 : vector<2x1xf32>
    %53 = math.rsqrt %52 : vector<2x1xf32>
    %54 = vector.broadcast %53 : vector<2x1xf32> to vector<2x32xf32>
    %55 = arith.mulf %45, %54 : vector<2x32xf32>
    %c0_26 = arith.constant 0 : index
    %c0_27 = arith.constant 0 : index
    %56 = vector.load %arg8[%c0_26, %c0_27] : memref<1x32xf32, #tpu.memory_space<vmem>>, vector<1x32xf32>
    %57 = vector.broadcast %56 : vector<1x32xf32> to vector<2x32xf32>
    %58 = arith.mulf %55, %57 : vector<2x32xf32>
    %c0_28 = arith.constant 0 : index
    %c0_29 = arith.constant 0 : index
    %59 = vector.load %arg9[%c0_28, %c0_29] : memref<1x32xf32, #tpu.memory_space<vmem>>, vector<1x32xf32>
    %60 = vector.broadcast %59 : vector<1x32xf32> to vector<2x32xf32>
    %61 = arith.addf %58, %60 : vector<2x32xf32>
    %62 = arith.truncf %61 : vector<2x32xf32> to vector<2x32xbf16>
    %c0_30 = arith.constant 0 : index
    %c0_31 = arith.constant 0 : index
    %63 = vector.load %arg10[%c0_30, %c0_31] : memref<32x128xbf16, #tpu.memory_space<vmem>>, vector<32x128xbf16>
    %cst_32 = arith.constant dense<0.000000e+00> : vector<2x128xf32>
    %64 = tpu.matmul %62, %63, %cst_32 {dimension_numbers = #tpu.dot_dimension_numbers<[1], [0], [0], [1], [0, 0, 1, 1], [], []>} : vector<2x32xbf16>, vector<32x128xbf16>, vector<2x128xf32> -> vector<2x128xf32>
    %c0_33 = arith.constant 0 : index
    %c0_34 = arith.constant 0 : index
    %65 = vector.load %arg11[%c0_33, %c0_34] : memref<1x128xf32, #tpu.memory_space<vmem>>, vector<1x128xf32>
    %66 = vector.broadcast %65 : vector<1x128xf32> to vector<2x128xf32>
    %67 = arith.addf %64, %66 : vector<2x128xf32>
    %c0_35 = arith.constant 0 : index
    %c0_36 = arith.constant 0 : index
    %68 = vector.load %arg12[%c0_35, %c0_36] : memref<2x128xf32, #tpu.memory_space<vmem>>, vector<2x128xf32>
    tpu.vector_store %arg12[%c0_35, %c0_36], %67 {strides = array<i32>} : memref<2x128xf32, #tpu.memory_space<vmem>>, vector<2x128xf32>,
    return
  }
  func.func @transform_0(%arg0: i32) -> (i32, i32) {
    %c0_i32 = arith.constant 0 : i32
    %c0_i32_0 = arith.constant 0 : i32
    return %arg0, %c0_i32 : i32, i32
  }
  func.func @transform_1(%arg0: i32) -> (i32, i32) {
    %c0_i32 = arith.constant 0 : i32
    %c0_i32_0 = arith.constant 0 : i32
    %c0_i32_1 = arith.constant 0 : i32
    return %c0_i32, %c0_i32_0 : i32, i32
  }
  func.func @transform_2(%arg0: i32) -> (i32, i32) {
    %c0_i32 = arith.constant 0 : i32
    %c0_i32_0 = arith.constant 0 : i32
    %c0_i32_1 = arith.constant 0 : i32
    return %c0_i32, %c0_i32_0 : i32, i32
  }
  func.func @transform_3(%arg0: i32) -> (i32, i32) {
    %c0_i32 = arith.constant 0 : i32
    %c0_i32_0 = arith.constant 0 : i32
    %c0_i32_1 = arith.constant 0 : i32
    return %c0_i32, %c0_i32_0 : i32, i32
  }
  func.func @transform_4(%arg0: i32) -> (i32, i32) {
    %c0_i32 = arith.constant 0 : i32
    %c0_i32_0 = arith.constant 0 : i32
    %c0_i32_1 = arith.constant 0 : i32
    return %c0_i32, %c0_i32_0 : i32, i32
  }
  func.func @transform_5(%arg0: i32) -> (i32, i32) {
    %c0_i32 = arith.constant 0 : i32
    %c0_i32_0 = arith.constant 0 : i32
    %c0_i32_1 = arith.constant 0 : i32
    return %c0_i32, %c0_i32_0 : i32, i32
  }
  func.func @transform_6(%arg0: i32) -> (i32, i32) {
    %c0_i32 = arith.constant 0 : i32
    %c0_i32_0 = arith.constant 0 : i32
    %c0_i32_1 = arith.constant 0 : i32
    return %c0_i32, %c0_i32_0 : i32, i32
  }
  func.func @transform_7(%arg0: i32) -> (i32, i32) {
    %c0_i32 = arith.constant 0 : i32
    %c0_i32_0 = arith.constant 0 : i32
    %c0_i32_1 = arith.constant 0 : i32
    return %c0_i32, %c0_i32_0 : i32, i32
  }
  func.func @transform_8(%arg0: i32) -> (i32, i32) {
    %c0_i32 = arith.constant 0 : i32
    %c0_i32_0 = arith.constant 0 : i32
    %c0_i32_1 = arith.constant 0 : i32
    return %c0_i32, %c0_i32_0 : i32, i32
  }
  func.func @transform_9(%arg0: i32) -> (i32, i32) {
    %c0_i32 = arith.constant 0 : i32
    %c0_i32_0 = arith.constant 0 : i32
    %c0_i32_1 = arith.constant 0 : i32
    return %c0_i32, %c0_i32_0 : i32, i32
  }
  func.func @transform_10(%arg0: i32) -> (i32, i32) {
    %c0_i32 = arith.constant 0 : i32
    %c0_i32_0 = arith.constant 0 : i32
    %c0_i32_1 = arith.constant 0 : i32
    return %c0_i32, %c0_i32_0 : i32, i32
  }
  func.func @transform_11(%arg0: i32) -> (i32, i32) {
    %c0_i32 = arith.constant 0 : i32
    %c0_i32_0 = arith.constant 0 : i32
    return %arg0, %c0_i32 : i32, i32
  }
}

</mosaic_0001>

<llo_original>
// kernel: tpu_custom_call.1
$region0: #{tpu_custom_call.1}
  #allocation0 [shape = 'u32[]', space=smem, size = 0x4, offset = 0x4, fixed_abs, tag = 'smem constant byte address 0x4 - core index']
  #allocation1 [shape = 'u32[72,128]{1,0:T(1,128)}', space=vmem, size = 0x9000, scoped, tag = 'internal scratch']
  %s0 = inlined_call_operand.hbm [shape: bf16[2,32], index: 0, kind: input, shape index: {}]
  %s1 = inlined_call_operand.hbm [shape: bf16[32,32], index: 1, kind: input, shape index: {}]
  %s2 = inlined_call_operand.vmem [shape: f32[1,32], index: 2, kind: input, shape index: {}]
  %s3 = inlined_call_operand.vmem [shape: f32[1,32], index: 3, kind: input, shape index: {}]
  %s4 = inlined_call_operand.vmem [shape: f32[1,32], index: 4, kind: input, shape index: {}]
  %s5 = inlined_call_operand.hbm [shape: bf16[32,32], index: 5, kind: input, shape index: {}]
  %s6 = inlined_call_operand.vmem [shape: f32[1,32], index: 6, kind: input, shape index: {}]
  %s7 = inlined_call_operand.vmem [shape: f32[1,32], index: 7, kind: input, shape index: {}]
  %s8 = inlined_call_operand.vmem [shape: f32[1,32], index: 8, kind: input, shape index: {}]
  %s9 = inlined_call_operand.hbm [shape: bf16[32,128], index: 9, kind: input, shape index: {}]
  %s10 = inlined_call_operand.vmem [shape: f32[1,128], index: 10, kind: input, shape index: {}]
  %s11 = inlined_call_operand.hbm [shape: f32[2,128], index: 11, kind: output, shape index: {}]
  %s12 = sld [smem:[#allocation0]]
  $region70: #{tpu_custom_call.1} parent=0
    _
  %s14 = ssub.s32 1, %s12
  %s15 = scalar_select 0, %s14, %s12
  $region1: #{tpu_custom_call.1} parent=0
    #allocation2 [shape = 'u8[512]{0}', space=vmem, size = 0x400, scoped, tag = 'input window, operand 0, single buffered']
    #allocation3 [shape = 's32[1]{0}', space=sflag, size = 0x4, scoped, tag = 'scoped memory for tpu_custom_call.1']
    #allocation4 [shape = 's32[1]{0}', space=sflag, size = 0x4, scoped, tag = 'scoped memory for tpu_custom_call.1']
    #allocation5 [shape = 'u8[8192]{0}', space=vmem, size = 0x2000, scoped, tag = 'input window, operand 1, single buffered']
    #allocation6 [shape = 's32[1]{0}', space=sflag, size = 0x4, scoped, tag = 'scoped memory for tpu_custom_call.1']
    #allocation7 [shape = 'u8[8192]{0}', space=vmem, size = 0x2000, scoped, tag = 'input window, operand 5, single buffered']
    #allocation8 [shape = 'u8[8192]{0}', space=vmem, size = 0x2000, scoped, tag = 'input window, operand 9, single buffered']
    #allocation9 [shape = 's32[1]{0}', space=sflag, size = 0x4, scoped, tag = 'scoped memory for tpu_custom_call.1']
    #allocation10 [shape = 'u8[1024]{0}', space=vmem, size = 0x400, scoped, tag = 'output window, operand 0, single buffered']
    %16 = vsyncpa [#allocation3], 0
    %17 = vsyncpa [#allocation6], 0
    %18 = vsyncpa [#allocation9], 0
    %19 = vsyncpa [#allocation4], 0
    // Predicated region
    $region2: #{tpu_custom_call.1} parent=1 // pred_check
      _
    $region3: #{tpu_custom_call.1} parent=1 // pred_check_branch
      %21 = sbr.rel (0) target = $region5
    $region4: #{tpu_custom_call.1} parent=1 // pred_region
      %23 = vsyncadd [#allocation3], 0
      %s25 = sshll.u32 %s0, 4
      %s26 = int_to_ptr.hbm [resolvable:$true] %s25
      %s27 = sshll.u32 [#allocation2], 4
      %s28 = int_to_ptr.vmem [resolvable:$true] %s27
      %30 = dma.hbm_to_vmem [thread:$0]  %s26, 16, %s28, [#allocation3]
    $region5: #{tpu_custom_call.1} parent=1 // pred_fallthru
      _
    // Predicated region
    $region6: #{tpu_custom_call.1} parent=1 // pred_check
      _
    $region7: #{tpu_custom_call.1} parent=1 // pred_check_branch
      %32 = sbr.rel (0) target = $region9
    $region8: #{tpu_custom_call.1} parent=1 // pred_region
      %34 = vsyncadd [#allocation6], 0
      %s35 = sshll.u32 %s1, 4
      %s36 = int_to_ptr.hbm [resolvable:$true] %s35
      %s37 = sshll.u32 [#allocation5], 4
      %s38 = int_to_ptr.vmem [resolvable:$true] %s37
      %43 = dma.hbm_to_vmem [thread:$0]  %s36, 256, %s38, [#allocation6], 64, 64, 4
    $region9: #{tpu_custom_call.1} parent=1 // pred_fallthru
      _
    // Predicated region
    $region10: #{tpu_custom_call.1} parent=1 // pred_check
      _
    $region11: #{tpu_custom_call.1} parent=1 // pred_check_branch
      %45 = sbr.rel (0) target = $region13
    $region12: #{tpu_custom_call.1} parent=1 // pred_region
      _
    $region13: #{tpu_custom_call.1} parent=1 // pred_fallthru
      _
    // Predicated region
    $region14: #{tpu_custom_call.1} parent=1 // pred_check
      _
    $region15: #{tpu_custom_call.1} parent=1 // pred_check_branch
      %47 = sbr.rel (0) target = $region17
    $region16: #{tpu_custom_call.1} parent=1 // pred_region
      _
    $region17: #{tpu_custom_call.1} parent=1 // pred_fallthru
      _
    // Predicated region
    $region18: #{tpu_custom_call.1} parent=1 // pred_check
      _
    $region19: #{tpu_custom_call.1} parent=1 // pred_check_branch
      %49 = sbr.rel (0) target = $region21
    $region20: #{tpu_custom_call.1} parent=1 // pred_region
      _
    $region21: #{tpu_custom_call.1} parent=1 // pred_fallthru
      _
    // Predicated region
    $region22: #{tpu_custom_call.1} parent=1 // pred_check
      _
    $region23: #{tpu_custom_call.1} parent=1 // pred_check_branch
      %51 = sbr.rel (0) target = $region25
    $region24: #{tpu_custom_call.1} parent=1 // pred_region
      %53 = vsyncadd [#allocation6], 0
      %s54 = sshll.u32 %s5, 4
      %s55 = int_to_ptr.hbm [resolvable:$true] %s54
      %s56 = sshll.u32 [#allocation7], 4
      %s57 = int_to_ptr.vmem [resolvable:$true] %s56
      %62 = dma.hbm_to_vmem [thread:$0]  %s55, 256, %s57, [#allocation6], 64, 64, 4
    $region25: #{tpu_custom_call.1} parent=1 // pred_fallthru
      _
    // Predicated region
    $region26: #{tpu_custom_call.1} parent=1 // pred_check
      _
    $region27: #{tpu_custom_call.1} parent=1 // pred_check_branch
      %64 = sbr.rel (0) target = $region29
    $region28: #{tpu_custom_call.1} parent=1 // pred_region
      _
    $region29: #{tpu_custom_call.1} parent=1 // pred_fallthru
      _
    // Predicated region
    $region30: #{tpu_custom_call.1} parent=1 // pred_check
      _
    $region31: #{tpu_custom_call.1} parent=1 // pred_check_branch
      %66 = sbr.rel (0) target = $region33
    $region32: #{tpu_custom_call.1} parent=1 // pred_region
      _
    $region33: #{tpu_custom_call.1} parent=1 // pred_fallthru
      _
    // Predicated region
    $region34: #{tpu_custom_call.1} parent=1 // pred_check
      _
    $region35: #{tpu_custom_call.1} parent=1 // pred_check_branch
      %68 = sbr.rel (0) target = $region37
    $region36: #{tpu_custom_call.1} parent=1 // pred_region
      _
    $region37: #{tpu_custom_call.1} parent=1 // pred_fallthru
      _
    // Predicated region
    $region38: #{tpu_custom_call.1} parent=1 // pred_check
      _
    $region39: #{tpu_custom_call.1} parent=1 // pred_check_branch
      %70 = sbr.rel (0) target = $region41
    $region40: #{tpu_custom_call.1} parent=1 // pred_region
      %72 = vsyncadd [#allocation9], 0
      %s73 = sshll.u32 %s9, 4
      %s74 = int_to_ptr.hbm [resolvable:$true] %s73
      %s75 = sshll.u32 [#allocation8], 4
      %s76 = int_to_ptr.vmem [resolvable:$true] %s75
      %81 = dma.hbm_to_vmem [thread:$0]  %s74, 256, %s76, [#allocation9], 64, 64, 4
    $region41: #{tpu_custom_call.1} parent=1 // pred_fallthru
      _
    // Predicated region
    $region42: #{tpu_custom_call.1} parent=1 // pred_check
      _
    $region43: #{tpu_custom_call.1} parent=1 // pred_check_branch
      %83 = sbr.rel (0) target = $region45
    $region44: #{tpu_custom_call.1} parent=1 // pred_region
      _
    $region45: #{tpu_custom_call.1} parent=1 // pred_fallthru
      _
    // Predicated region
    $region46: #{tpu_custom_call.1} parent=1 // pred_check
      _
    $region47: #{tpu_custom_call.1} parent=1 // pred_check_branch
      %85 = sbr.rel (0) target = $region49
    $region48: #{tpu_custom_call.1} parent=1 // pred_region
      %87 = dma.done [#allocation3], 16
    $region49: #{tpu_custom_call.1} parent=1 // pred_fallthru
      _
    // Predicated region
    $region50: #{tpu_custom_call.1} parent=1 // pred_check
      _
    $region51: #{tpu_custom_call.1} parent=1 // pred_check_branch
      %89 = sbr.rel (0) target = $region53
    $region52: #{tpu_custom_call.1} parent=1 // pred_region
      %91 = dma.done [#allocation6], 256
    $region53: #{tpu_custom_call.1} parent=1 // pred_fallthru
      _
    // Predicated region
    $region54: #{tpu_custom_call.1} parent=1 // pred_check
      _
    $region55: #{tpu_custom_call.1} parent=1 // pred_check_branch
      %93 = sbr.rel (0) target = $region57
    $region56: #{tpu_custom_call.1} parent=1 // pred_region
      %95 = dma.done [#allocation6], 256
    $region57: #{tpu_custom_call.1} parent=1 // pred_fallthru
      _
    // Predicated region
    $region58: #{tpu_custom_call.1} parent=1 // pred_check
      _
    $region59: #{tpu_custom_call.1} parent=1 // pred_check_branch
      %97 = sbr.rel (0) target = $region61
    $region60: #{tpu_custom_call.1} parent=1 // pred_region
      %99 = dma.done [#allocation9], 256
    $region61: #{tpu_custom_call.1} parent=1 // pred_fallthru
      _
    %v101 = vld [vmem:[#allocation2] sm:$0x1]
    %v102 = vld [vmem:[#allocation5] sm:$0xf]
    %v103 = vld [vmem:[#allocation5 + $0x4] sm:$0xf]
    %v104 = vld [vmem:[#allocation5 + $0x8] sm:$0xf]
    %v105 = vld [vmem:[#allocation5 + $0xc] sm:$0xf]
    %v106 = vld [vmem:[%s2] sm:$0x1]
    %v108 = vperm.slane %v106, 0
    %v114 = vunpack.c.l.b16 %v102
    %v115 = vunpack.c.l.b16 %v103
    %v116 = vunpack.c.l.b16 %v104
    %v117 = vunpack.c.l.b16 %v105
    %v118 = vpack.c.b16 %v115, %v114
    %v119 = vpack.c.b16 %v117, %v116
    %vm122 = vcmask 261120
    %v124 = vsel %vm122, %v101, 0
    %126 = vmatpush.bf16.msra.mxu0 0
    %127 = vmatpush.bf16.msra.mxu0 0
    %128 = vmatpush.bf16.msra.mxu0 0
    %129 = vmatpush.bf16.msra.mxu0 0
    %130 = vmatpush.bf16.msra.mxu0 0
    %131 = vmatpush.bf16.msra.mxu0 0
    %132 = vmatpush.bf16.msra.mxu0 %v119
    %133 = vmatpush.bf16.msra.mxu0 %v118
    %134 = vmatmul.bf16.gmra.mxu0 %v124
    %v135 = vpop.f32.mrf.mxu0
    %v136 = vadd.f32 %v108, %v135
    %v137 = vpop.f32.mrf.mxu0
    %138 = vdwg.mxu0
    %v139 = vmul.f32 %v136, 0.01
    %v140 = vmax.f32 %v136, %v139
    %vm141 = vcmask 254976
    %v142 = vsel %vm141, %v140, 0.0
    %143 = vadd.xlane.f32.xlu0 %v142
    %v144 = vpop.xlane.xlu0 %143
    %v145 = vrcp.pop 32.0
    %v146 = vmul.f32 32.0, %v145
    %v147 = vsub.f32 1.0, %v146
    %v148 = vmul.f32 %v145, %v147
    %v149 = vadd.f32 %v145, %v148
    %vm150 = vweird.f32 %v145
    %v151 = vsel %vm150, %v145, %v149
    %v152 = vmul.f32 %v144, %v151
    %v153 = vsub.f32 %v140, %v152
    %v154 = vmul.f32 %v153, %v153
    %v155 = vsel %vm141, %v154, 0.0
    %156 = vadd.xlane.f32.xlu0 %v155
    %v157 = vpop.xlane.xlu0 %156
    %v158 = vmul.f32 %v157, %v151
    %v159 = vadd.f32 %v158, 1e-05
    %v160 = vrsqrt.pop %v159
    %v161 = vmul.f32 %v160, %v159
    %v162 = vmul.f32 %v161, %v160
    %v163 = vmul.f32 0.5, %v162
    %v164 = vsub.f32 1.5, %v163
    %v165 = vmul.f32 %v160, %v164
    %vm166 = vweird.f32 %v159
    %vm167 = vweird.f32 %v160
    %vm168 = vmor %vm166, %vm167
    %v169 = vsel %vm168, %v160, %v165
    %v170 = vmul.f32 %v153, %v169
    %v171 = vld [vmem:[%s3] sm:$0x1]
    %v173 = vperm.slane %v171, 0
    %v175 = vmul.f32 %v170, %v173
    %v176 = vld [vmem:[%s4] sm:$0x1]
    %v178 = vperm.slane %v176, 0
    %v180 = vadd.f32 %v175, %v178
    %v181 = vpack.c.bf16 %v180, %v180
    %v182 = vld [vmem:[#allocation7] sm:$0xf]
    %v183 = vld [vmem:[#allocation7 + $0x4] sm:$0xf]
    %v184 = vld [vmem:[#allocation7 + $0x8] sm:$0xf]
    %v185 = vld [vmem:[#allocation7 + $0xc] sm:$0xf]
    %v186 = vld [vmem:[%s6] sm:$0x1]
    %v188 = vperm.slane %v186, 0
    %v194 = vunpack.c.l.b16 %v182
    %v195 = vunpack.c.l.b16 %v183
    %v196 = vunpack.c.l.b16 %v184
    %v197 = vunpack.c.l.b16 %v185
    %v198 = vpack.c.b16 %v195, %v194
    %v199 = vpack.c.b16 %v197, %v196
    %v203 = vsel %vm122, %v181, 0
    %205 = vmatpush.bf16.msra.mxu0 0
    %206 = vmatpush.bf16.msra.mxu0 0
    %207 = vmatpush.bf16.msra.mxu0 0
    %208 = vmatpush.bf16.msra.mxu0 0
    %209 = vmatpush.bf16.msra.mxu0 0
    %210 = vmatpush.bf16.msra.mxu0 0
    %211 = vmatpush.bf16.msra.mxu0 %v199
    %212 = vmatpush.bf16.msra.mxu0 %v198
    %213 = vmatmul.bf16.gmra.mxu0 %v203
    %v214 = vpop.f32.mrf.mxu0
    %v215 = vadd.f32 %v188, %v214
    %v216 = vpop.f32.mrf.mxu0
    %217 = vdwg.mxu0
    %v218 = vmul.f32 %v215, 0.01
    %v219 = vmax.f32 %v215, %v218
    %v220 = vsel %vm141, %v219, 0.0
    %221 = vadd.xlane.f32.xlu0 %v220
    %v222 = vpop.xlane.xlu0 %221
    %v223 = vmul.f32 %v222, %v151
    %v224 = vsub.f32 %v219, %v223
    %v225 = vmul.f32 %v224, %v224
    %v226 = vsel %vm141, %v225, 0.0
    %227 = vadd.xlane.f32.xlu0 %v226
    %v228 = vpop.xlane.xlu0 %227
    %v229 = vmul.f32 %v228, %v151
    %v230 = vadd.f32 %v229, 1e-05
    %v231 = vrsqrt.pop %v230
    %v232 = vmul.f32 %v231, %v230
    %v233 = vmul.f32 %v232, %v231
    %v234 = vmul.f32 0.5, %v233
    %v235 = vsub.f32 1.5, %v234
    %v236 = vmul.f32 %v231, %v235
    %vm237 = vweird.f32 %v230
    %vm238 = vweird.f32 %v231
    %vm239 = vmor %vm237, %vm238
    %v240 = vsel %vm239, %v231, %v236
    %v241 = vmul.f32 %v224, %v240
    %v242 = vld [vmem:[%s7] sm:$0x1]
    %v244 = vperm.slane %v242, 0
    %v246 = vmul.f32 %v241, %v244
    %v247 = vld [vmem:[%s8] sm:$0x1]
    %v249 = vperm.slane %v247, 0
    %v251 = vadd.f32 %v246, %v249
    %v252 = vpack.c.bf16 %v251, %v251
    %v253 = vld [vmem:[#allocation8] sm:$0xf]
    %v254 = vld [vmem:[#allocation8 + $0x4] sm:$0xf]
    %v255 = vld [vmem:[#allocation8 + $0x8] sm:$0xf]
    %v256 = vld [vmem:[#allocation8 + $0xc] sm:$0xf]
    %v257 = vld [vmem:[%s10] sm:$0x1]
    %v259 = vperm.slane %v257, 0
    %v265 = vunpack.c.l.b16 %v253
    %v266 = vunpack.c.l.b16 %v254
    %v267 = vunpack.c.l.b16 %v255
    %v268 = vunpack.c.l.b16 %v256
    %v269 = vpack.c.b16 %v266, %v265
    %v270 = vpack.c.b16 %v268, %v267
    %v274 = vsel %vm122, %v252, 0
    %276 = vmatpush.bf16.msra.mxu0 0
    %277 = vmatpush.bf16.msra.mxu0 0
    %278 = vmatpush.bf16.msra.mxu0 0
    %279 = vmatpush.bf16.msra.mxu0 0
    %280 = vmatpush.bf16.msra.mxu0 0
    %281 = vmatpush.bf16.msra.mxu0 0
    %282 = vmatpush.bf16.msra.mxu0 %v270
    %283 = vmatpush.bf16.msra.mxu0 %v269
    %284 = vmatmul.bf16.gmra.mxu0 %v274
    %v285 = vpop.f32.mrf.mxu0
    %v286 = vadd.f32 %v259, %v285
    %v287 = vpop.f32.mrf.mxu0
    %288 = vdwg.mxu0
    %289 = vst [vmem:[#allocation10] sm:$0x3] %v286
    // Predicated region
    $region62: #{tpu_custom_call.1} parent=1 // pred_check
      _
    $region63: #{tpu_custom_call.1} parent=1 // pred_check_branch
      %291 = sbr.rel (0) target = $region65
    $region64: #{tpu_custom_call.1} parent=1 // pred_region
      %293 = vsyncadd [#allocation4], 0
      %s295 = sshll.u32 [#allocation10], 4
      %s296 = int_to_ptr.vmem [resolvable:$true] %s295
      %s297 = sshll.u32 %s11, 4
      %s298 = int_to_ptr.hbm [resolvable:$true] %s297
      %300 = dma.vmem_to_hbm [thread:$0]  %s296, 32, %s298, [#allocation4]
    $region65: #{tpu_custom_call.1} parent=1 // pred_fallthru
      _
    // Predicated region
    $region66: #{tpu_custom_call.1} parent=1 // pred_check
      _
    $region67: #{tpu_custom_call.1} parent=1 // pred_check_branch
      %302 = sbr.rel (0) target = $region69
    $region68: #{tpu_custom_call.1} parent=1 // pred_region
      %304 = dma.done [#allocation4], 32
    $region69: #{tpu_custom_call.1} parent=1 // pred_fallthru
      _
    %305 = vsyncpa [#allocation3], 1
    %306 = vsyncpa [#allocation6], 1
    %307 = vsyncpa [#allocation9], 1
    %308 = vsyncpa [#allocation4], 1

</llo_original>
